<compile_context>
chip_gen: v5e
topology: v5e:2x2
jax: 0.10.0
libtpu: 0.0.40
codegen_flags: <defaults>
</compile_context>

<pallas_src>
import functools

import jax
import jax.numpy as jnp
from jax import lax
from jax.experimental import pallas as pl
from jax.experimental.pallas import tpu as pltpu

_IGNORE_INDEX = -100  # PyTorch CrossEntropyLoss default
_MIN_SUBLANE = {4: 8, 2: 16, 1: 32}  # itemsize -> minimum second-minor block size


def _domain_loss_kernel(*refs, n_total, tile_n, has_weight):
    """One row-tile: per-row CE, optional per-sample weight, reduced to one partial sum."""
    if has_weight:
        pred_ref, tgt_ref, w_ref, out_ref = refs
    else:
        pred_ref, tgt_ref, out_ref = refs
        w_ref = None

    logits = pred_ref[...].astype(jnp.float32)                       # (TN, C) f32 in-vreg
    tn, c = logits.shape

    # Numerically stable log-sum-exp; keep one live (TN, C) temporary ("shifted").
    m = jnp.max(logits, axis=-1, keepdims=True)                      # (TN, 1)
    shifted = logits - m                                             # (TN, C)
    sumexp = jnp.sum(jnp.exp(shifted), axis=-1, keepdims=True)       # (TN, 1)

    # Pick the target logit via one-hot select against a (1, C) lane iota (broadcasts).
    cls_ids = lax.broadcasted_iota(jnp.int32, (1, c), 1)             # (1, C)
    tgt = tgt_ref[...]                                               # (TN, 1) int32
    picked = jnp.sum(jnp.where(cls_ids == tgt, shifted, 0.0),
                     axis=-1, keepdims=True)                         # (TN, 1) = logit[t] - m

    loss = jnp.log(sumexp) - picked                                  # (TN, 1) = lse - logit[t]

    if has_weight:
        loss = loss * w_ref[...].astype(jnp.float32)                 # per-sample weight

    # Mask ragged rows of the last tile (global row >= N) and ignore_index rows.
    # jnp.where discards any garbage/NaN coming from the OOB part of the edge block.
    row_ids = pl.program_id(0) * tile_n + lax.broadcasted_iota(jnp.int32, (tn, 1), 0)
    valid = jnp.logical_and(row_ids < n_total, tgt != _IGNORE_INDEX)
    partial = jnp.sum(jnp.where(valid, loss, 0.0))                   # scalar partial sum

    # Lane-dense, (8,128)-aligned output block; wrapper reads rows 0, 8, 16, ... lane 0.
    out_ref[...] = jnp.broadcast_to(partial, out_ref.shape).astype(jnp.float32)


def _choose_tile_n(n, c, dtype, tile_n=None, target_bytes=2 << 20, max_tn=1024):
    """Pick a row-tile size: multiple of the dtype's min sublane, ~2 MiB per buffer."""
    itemsize = jnp.dtype(dtype).itemsize
    sub = _MIN_SUBLANE.get(itemsize, 8)
    n_up = -(-n // sub) * sub
    if tile_n is not None:
        tn = max(sub, (tile_n // sub) * sub)
    else:
        tn = target_bytes // max(1, c * itemsize)
        tn = max(sub, min(max_tn, (tn // sub) * sub))
    return min(tn, n_up)


@functools.partial(jax.jit, static_argnames=("tile_n",))
def domain_loss(pred, target, sample_idx=None, *, tile_n=None):
    """pred: (N, C) logits (f32 or bf16), target: (N,) int class ids,
    sample_idx: optional (N,) float weights. Returns scalar f32 mean loss."""
    n, c = pred.shape
    has_weight = sample_idx is not None
    tgt = target.astype(jnp.int32).reshape(n, 1)

    tn = _choose_tile_n(n, c, pred.dtype, tile_n)
    num_tiles = pl.cdiv(n, tn)
    itemsize = jnp.dtype(pred.dtype).itemsize

    kernel = functools.partial(
        _domain_loss_kernel, n_total=n, tile_n=tn, has_weight=has_weight)

    in_specs = [
        pl.BlockSpec((tn, c), lambda i: (i, 0)),   # pred streamed in its native dtype
        pl.BlockSpec((tn, 1), lambda i: (i, 0)),   # target column
    ]
    args = [pred, tgt]
    if has_weight:
        in_specs.append(pl.BlockSpec((tn, 1), lambda i: (i, 0)))
        args.append(sample_idx.astype(jnp.float32).reshape(n, 1))

    per_sample_bytes = c * itemsize + 4 + (4 if has_weight else 0)
    out = pl.pallas_call(
        kernel,
        out_shape=jax.ShapeDtypeStruct((num_tiles * 8, 128), jnp.float32),
        grid=(num_tiles,),
        in_specs=in_specs,
        out_specs=pl.BlockSpec((8, 128), lambda i: (i, 0)),
        compiler_params=pltpu.CompilerParams(
            dimension_semantics=("parallel",),      # shard row tiles across TCs on v7x
        ),
        cost_estimate=pl.CostEstimate(
            flops=int(5 * num_tiles * tn * c),
            transcendentals=int(num_tiles * tn * c),
            bytes_accessed=int(num_tiles * tn * per_sample_bytes
                               + num_tiles * 8 * 128 * 4),
        ),
    )(*args)

    # One partial sum per tile lives at rows 0, 8, 16, ... of lane 0.
    total = jnp.sum(out[::8, 0])
    return total / jnp.float32(n)   # divide by the global N, matching .mean()


def _domain_loss_ref(pred, target, sample_idx=None):
    logits = pred.astype(jnp.float32)
    lse = jax.scipy.special.logsumexp(logits, axis=-1)
    picked = jnp.take_along_axis(logits, target[:, None].astype(jnp.int32), axis=-1)[:, 0]
    loss = lse - picked
    loss = jnp.where(target == _IGNORE_INDEX, 0.0, loss)
    if sample_idx is not None:
        loss = loss * sample_idx.astype(jnp.float32)
    return jnp.mean(loss)


if __name__ == "__main__":
    key = jax.random.PRNGKey(0)
    k1, k2, k3, k4, k5 = jax.random.split(key, 5)

    # Small shapes consistent with a domain-classifier head: batch=8, 32 domain classes.
    N, C = 8, 32
    pred = jax.random.normal(k1, (N, C), dtype=jnp.float32)
    target = jax.random.randint(k2, (N,), 0, C, dtype=jnp.int32)
    sample_idx = jax.random.uniform(k3, (N,), dtype=jnp.float32)

    # Weighted path.
    out_w = domain_loss(pred, target, sample_idx)
    jax.block_until_ready(out_w)
    ref_w = _domain_loss_ref(pred, target, sample_idx)
    assert jnp.allclose(out_w, ref_w, atol=1e-5, rtol=1e-5), (out_w, ref_w)

    # Unweighted path (statically specialized kernel: no weight DMA at all).
    out_u = domain_loss(pred, target, None)
    jax.block_until_ready(out_u)
    ref_u = _domain_loss_ref(pred, target, None)
    assert jnp.allclose(out_u, ref_u, atol=1e-5, rtol=1e-5), (out_u, ref_u)

    # Multi-tile + ragged-N path: 20 rows, 8-row tiles -> 3 tiles, 4 rows masked in-kernel.
    N2 = 20
    pred2 = jax.random.normal(k4, (N2, C), dtype=jnp.float32)
    target2 = jax.random.randint(k5, (N2,), 0, C, dtype=jnp.int32)
    w2 = jax.random.uniform(k3, (N2,), dtype=jnp.float32)
    out_t = domain_loss(pred2, target2, w2, tile_n=8)
    jax.block_until_ready(out_t)
    ref_t = _domain_loss_ref(pred2, target2, w2)
    assert jnp.allclose(out_t, ref_t, atol=1e-5, rtol=1e-5), (out_t, ref_t)

    # bf16 logits streamed as bf16 through the DMA, f32 math in-kernel (ragged: 2 tiles of 16).
    pred_bf = pred2.astype(jnp.bfloat16)
    out_bf = domain_loss(pred_bf, target2, w2, tile_n=16)
    jax.block_until_ready(out_bf)
    ref_bf = _domain_loss_ref(pred_bf.astype(jnp.float32), target2, w2)
    assert jnp.allclose(out_bf, ref_bf, atol=2e-2, rtol=2e-2), (out_bf, ref_bf)

    print("KERNEL_OK")
</pallas_src>

<mosaic_0001>
module attributes {stable_mosaic.version = 11 : i64} {
  func.func @_domain_loss_kernel(%arg0: i32, %arg1: memref<8x32xf32, #tpu.memory_space<vmem>>, %arg2: memref<8x1xi32, #tpu.memory_space<vmem>>, %arg3: memref<8x1xf32, #tpu.memory_space<vmem>>, %arg4: memref<8x128xf32, #tpu.memory_space<vmem>>) attributes {dimension_semantics = [#tpu.dimension_semantics<parallel>], iteration_bounds = array<i64: 1>, scalar_prefetch = 0 : i64, scratch_operands = 0 : i64, tpu.core_type = #tpu.core_type<tc>, window_params = [{transform_indices = @transform_0, window_bounds = array<i64: 8, 32>}, {transform_indices = @transform_1, window_bounds = array<i64: 8, 1>}, {transform_indices = @transform_2, window_bounds = array<i64: 8, 1>}, {transform_indices = @transform_3, window_bounds = array<i64: 8, 128>}]} {
    %c0 = arith.constant 0 : index
    %c0_0 = arith.constant 0 : index
    %0 = vector.load %arg1[%c0, %c0_0] : memref<8x32xf32, #tpu.memory_space<vmem>>, vector<8x32xf32>
    %cst = arith.constant dense<0xFF800000> : vector<8xf32>
    %1 = vector.multi_reduction <maximumf>, %0, %cst [1] : vector<8x32xf32> to vector<8xf32>
    %2 = vector.shape_cast %1 : vector<8xf32> to vector<8x1xf32>
    %3 = vector.broadcast %2 : vector<8x1xf32> to vector<8x32xf32>
    %4 = arith.subf %0, %3 : vector<8x32xf32>
    %5 = math.exp %4 : vector<8x32xf32>
    %cst_1 = arith.constant dense<0.000000e+00> : vector<8xf32>
    %6 = vector.multi_reduction <add>, %5, %cst_1 [1] : vector<8x32xf32> to vector<8xf32>
    %7 = vector.shape_cast %6 : vector<8xf32> to vector<8x1xf32>
    %8 = tpu.iota {dimensions = array<i32: 1>} : vector<1x32xi32>
    %c0_2 = arith.constant 0 : index
    %c0_3 = arith.constant 0 : index
    %9 = vector.load %arg2[%c0_2, %c0_3] : memref<8x1xi32, #tpu.memory_space<vmem>>, vector<8x1xi32>
    %10 = vector.broadcast %8 : vector<1x32xi32> to vector<8x32xi32>
    %11 = vector.broadcast %9 : vector<8x1xi32> to vector<8x32xi32>
    %12 = arith.cmpi eq, %10, %11 : vector<8x32xi32>
    %cst_4 = arith.constant 0.000000e+00 : f32
    %13 = vector.broadcast %cst_4 : f32 to vector<8x32xf32>
    %14 = arith.select %12, %4, %13 : vector<8x32xi1>, vector<8x32xf32>
    %cst_5 = arith.constant dense<0.000000e+00> : vector<8xf32>
    %15 = vector.multi_reduction <add>, %14, %cst_5 [1] : vector<8x32xf32> to vector<8xf32>
    %16 = vector.shape_cast %15 : vector<8xf32> to vector<8x1xf32>
    %17 = math.log %7 : vector<8x1xf32>
    %18 = arith.subf %17, %16 : vector<8x1xf32>
    %c0_6 = arith.constant 0 : index
    %c0_7 = arith.constant 0 : index
    %19 = vector.load %arg3[%c0_6, %c0_7] : memref<8x1xf32, #tpu.memory_space<vmem>>, vector<8x1xf32>
    %20 = arith.mulf %18, %19 : vector<8x1xf32>
    %c8_i32 = arith.constant 8 : i32
    %21 = arith.muli %arg0, %c8_i32 : i32
    %22 = tpu.iota {dimensions = array<i32: 0>} : vector<8x1xi32>
    %23 = vector.broadcast %21 : i32 to vector<8x1xi32>
    %24 = arith.addi %23, %22 : vector<8x1xi32>
    %c8_i32_8 = arith.constant 8 : i32
    %25 = vector.broadcast %c8_i32_8 : i32 to vector<8x1xi32>
    %26 = arith.cmpi slt, %24, %25 : vector<8x1xi32>
    %c-100_i32 = arith.constant -100 : i32
    %27 = vector.broadcast %c-100_i32 : i32 to vector<8x1xi32>
    %28 = arith.cmpi ne, %9, %27 : vector<8x1xi32>
    %29 = arith.andi %26, %28 : vector<8x1xi1>
    %cst_9 = arith.constant 0.000000e+00 : f32
    %30 = vector.broadcast %cst_9 : f32 to vector<8x1xf32>
    %31 = arith.select %29, %20, %30 : vector<8x1xi1>, vector<8x1xf32>
    %32 = vector.shape_cast %31 : vector<8x1xf32> to vector<1x8x1xf32>
    %cst_10 = arith.constant dense<0.000000e+00> : vector<1xf32>
    %33 = vector.multi_reduction <add>, %32, %cst_10 [1, 2] : vector<1x8x1xf32> to vector<1xf32>
    %34 = vector.shape_cast %33 : vector<1xf32> to vector<1x1x1xf32>
    %35 = vector.extract %34[0, 0, 0] : f32 from vector<1x1x1xf32>
    %36 = vector.broadcast %35 : f32 to vector<8x128xf32>
    %c0_11 = arith.constant 0 : index
    %c0_12 = arith.constant 0 : index
    %37 = vector.load %arg4[%c0_11, %c0_12] : memref<8x128xf32, #tpu.memory_space<vmem>>, vector<8x128xf32>
    tpu.vector_store %arg4[%c0_11, %c0_12], %36 {strides = array<i32>} : memref<8x128xf32, #tpu.memory_space<vmem>>, vector<8x128xf32>,
    return
  }
  func.func @transform_0(%arg0: i32) -> (i32, i32) {
    %c0_i32 = arith.constant 0 : i32
    %c0_i32_0 = arith.constant 0 : i32
    return %arg0, %c0_i32 : i32, i32
  }
  func.func @transform_1(%arg0: i32) -> (i32, i32) {
    %c0_i32 = arith.constant 0 : i32
    %c0_i32_0 = arith.constant 0 : i32
    return %arg0, %c0_i32 : i32, i32
  }
  func.func @transform_2(%arg0: i32) -> (i32, i32) {
    %c0_i32 = arith.constant 0 : i32
    %c0_i32_0 = arith.constant 0 : i32
    return %arg0, %c0_i32 : i32, i32
  }
  func.func @transform_3(%arg0: i32) -> (i32, i32) {
    %c0_i32 = arith.constant 0 : i32
    %c0_i32_0 = arith.constant 0 : i32
    return %arg0, %c0_i32 : i32, i32
  }
}

</mosaic_0001>

<llo_original>
// kernel: domain_loss.1
$region0: #{domain_loss.1}
  #allocation0 [shape = 'u32[]', space=smem, size = 0x4, offset = 0x4, fixed_abs, tag = 'smem constant byte address 0x4 - core index']
  #allocation1 [shape = 'u32[72,128]{1,0:T(1,128)}', space=vmem, size = 0x9000, scoped, tag = 'internal scratch']
  %s0 = inlined_call_operand.vmem [shape: f32[8,32], index: 0, kind: input, shape index: {}]
  %s1 = inlined_call_operand.vmem [shape: s32[8,1], index: 1, kind: input, shape index: {}]
  %s2 = inlined_call_operand.vmem [shape: f32[8,1], index: 2, kind: input, shape index: {}]
  %s3 = inlined_call_operand.vmem [shape: f32[8,128], index: 3, kind: output, shape index: {}]
  %s4 = sld [smem:[#allocation0]]
  $region22: #{domain_loss.1} parent=0
    _
  %s6 = ssub.s32 1, %s4
  %s7 = scalar_select 0, %s6, %s4
  // Predicated region
  $region2: #{domain_loss.1} parent=0 // pred_check
    _
  $region3: #{domain_loss.1} parent=0 // pred_check_branch
    %9 = sbr.rel (0) target = $region5
  $region4: #{domain_loss.1} parent=0 // pred_region
    _
  $region5: #{domain_loss.1} parent=0 // pred_fallthru
    _
  // Predicated region
  $region6: #{domain_loss.1} parent=0 // pred_check
    _
  $region7: #{domain_loss.1} parent=0 // pred_check_branch
    %11 = sbr.rel (0) target = $region9
  $region8: #{domain_loss.1} parent=0 // pred_region
    _
  $region9: #{domain_loss.1} parent=0 // pred_fallthru
    _
  // Predicated region
  $region10: #{domain_loss.1} parent=0 // pred_check
    _
  $region11: #{domain_loss.1} parent=0 // pred_check_branch
    %13 = sbr.rel (0) target = $region13
  $region12: #{domain_loss.1} parent=0 // pred_region
    _
  $region13: #{domain_loss.1} parent=0 // pred_fallthru
    _
  %v14 = vld [vmem:[%s0] sm:$0xff]
  %vm15 = vcmask 261120
  %v16 = vsel %vm15, %v14, -inf
  %17 = vmax.xlane.f32.xlu0 %v16
  %v18 = vpop.xlane.xlu0 %17
  %v19 = vsub.f32 %v14, %v18
  %v20 = vmul.f32 %v19, 1.442695
  %v21 = vpow.pop %v20
  %v22 = vsel %vm15, %v21, 0.0
  %23 = vadd.xlane.f32.xlu0 %v22
  %v24 = vpop.xlane.xlu0 %23
  %v25 = vlaneseq
  %v26 = vand.u32 %v25, 127
  %v27 = vld [vmem:[%s1] sm:$0xff]
  %28 = vset.pattern.permute.xlu0 0
  %29 = vperm.xlu0 %28, %v27
  %v30 = vpop.permute.xlu0 %29
  %vm31 = vcmp.eq.s32.totalorder %v26, %v30
  %v32 = vsel %vm31, %v19, 0.0
  %v33 = vsel %vm15, %v32, 0.0
  %34 = vadd.xlane.f32.xlu0 %v33
  %v35 = vpop.xlane.xlu0 %34
  %v36 = vlog2.pop %v24
  %v37 = vmul.f32 %v36, 0.6931472
  %v38 = vsub.f32 %v37, %v35
  %v39 = vld [vmem:[%s2] sm:$0xff]
  %v40 = vmul.f32 %v38, %v39
  %s41 = smul.u32 0, 8
  %v42 = vlaneseq
  %v43 = vshrl.u32 %v42, 7
  %v44 = vstv %s41
  %v45 = vadd.s32 %v44, %v43
  %vm46 = vcmp.lt.s32.totalorder %v45, 8
  %vm47 = vcmp.ne.s32.totalorder %v27, 4294967196
  %vm48 = vmand %vm46, %vm47
  %v49 = vsel %vm48, %v40, 0.0
  %vm50 = vcmask 7168
  %v51 = vsel %vm50, %v49, 0.0
  %52 = vadd.xlane.f32.xlu0 %v51
  %v53 = vpop.xlane.xlu0 %52
  %v54 = vrot.slane %v53, 4
  %v55 = vadd.f32 %v53, %v54
  %v56 = vrot.slane %v55, 2
  %v57 = vadd.f32 %v55, %v56
  %v58 = vrot.slane %v57, 1
  %v59 = vadd.f32 %v57, %v58
  %s60 = vtos %v59
  %v61 = vstv %s60
  %62 = vst [vmem:[%s3] sm:$0xff] %v61
  // Predicated region
  $region14: #{domain_loss.1} parent=0 // pred_check
    _
  $region15: #{domain_loss.1} parent=0 // pred_check_branch
    %64 = sbr.rel (0) target = $region17
  $region16: #{domain_loss.1} parent=0 // pred_region
    _
  $region17: #{domain_loss.1} parent=0 // pred_fallthru
    _
  // Predicated region
  $region18: #{domain_loss.1} parent=0 // pred_check
    _
  $region19: #{domain_loss.1} parent=0 // pred_check_branch
    %66 = sbr.rel (0) target = $region21
  $region20: #{domain_loss.1} parent=0 // pred_region
    _
  $region21: #{domain_loss.1} parent=0 // pred_fallthru
    _

</llo_original>
